<compile_context>
chip_gen: v6e
topology: v6e:2x2x1
jax: 0.10.0
libtpu: 0.0.40
codegen_flags: <defaults>
</compile_context>

<pallas_src>
import jax
import jax.numpy as jnp
from jax.experimental import pallas as pl
from jax.experimental.pallas import tpu as pltpu

IN_FEATURES = 2 * 128      # 256
HIDDEN = 64
NUM_CLASSES_TARGET = 5     # params['num_classes_target'] (synthetic choice)
TILE_B_MAX = 4096          # double-buffered in+out at tb=4096 is ~8.5 MiB of VMEM


def _round_up(n, m):
    return ((n + m - 1) // m) * m


def _classifier_kernel(x_ref, w1_ref, b1_ref, w2_ref, b2_ref, out_ref):
    # x_ref: (TB, 256)   w1_ref: (256, 64)   b1_ref: (1, 64)
    # w2_ref: (64, CP)   b2_ref: (1, CP)     out_ref: (TB, CP)
    h = (jnp.dot(x_ref[...], w1_ref[...], preferred_element_type=jnp.float32)
         + b1_ref[...])
    # sigmoid(h) = 1 / (1 + exp(-h)); exp and the approximate reciprocal both run on the
    # EUP slot (vrcp), keeping the VALU free for the streaming pipeline.
    h = pl.reciprocal(1.0 + jnp.exp(-h), approx=True)
    pred = jnp.dot(h, w2_ref[...], preferred_element_type=jnp.float32) + b2_ref[...]
    out_ref[...] = pred.astype(out_ref.dtype)


def prepare_classifier_params(w1, b1, w2, b2):
    """One-time weight prep (hoisted out of the per-call path).

    w1: (256, 64), b1: (64,)|(1,64), w2: (64, C), b2: (C,)|(1,C).
    Returns params with the classifier head zero-padded to a multiple-of-8 lane width.
    """
    C = w2.shape[1]
    c_pad = _round_up(max(C, 8), 8)            # 5 -> 8
    w1 = w1.astype(jnp.float32)
    b1 = b1.reshape(1, HIDDEN).astype(jnp.float32)
    w2p = jnp.zeros((HIDDEN, c_pad), jnp.float32).at[:, :C].set(w2.astype(jnp.float32))
    b2p = jnp.zeros((1, c_pad), jnp.float32).at[:, :C].set(
        b2.reshape(1, C).astype(jnp.float32))
    return (w1, b1, w2p, b2p), C


def target_classifier_forward(emb, prepared, num_classes, *, tile_b=TILE_B_MAX):
    """emb: (B, 2, 128) float32 (or already-flat (B, 256))."""
    w1, b1, w2p, b2p = prepared
    B = emb.shape[0]
    c_pad = w2p.shape[1]

    # (B, 2, 128) -> (B, 256): layout-compatible (contiguous row-major) reshape, so XLA
    # lowers it to a bitcast - no extra HBM pass - while giving the kernel a clean
    # (8,128)-tiled activation block (no size-2 sublane dim, no in-kernel relayout).
    x = emb.reshape(B, IN_FEATURES).astype(jnp.float32)

    # Batch tile: large enough to amortize per-step overhead, capped at ~B/2 so the grid
    # has >= 2 steps for large B (v7x megacore gets both TensorCores working).
    tb = min(tile_b, max(8, _round_up(-(-B // 2), 8)))
    grid = (pl.cdiv(B, tb),)

    out = pl.pallas_call(
        _classifier_kernel,
        out_shape=jax.ShapeDtypeStruct((B, c_pad), jnp.float32),
        grid_spec=pltpu.PrefetchScalarGridSpec(
            num_scalar_prefetch=0,
            grid=grid,
            in_specs=[
                # Batch-tiled activation stream.
                pl.BlockSpec((tb, IN_FEATURES), lambda i: (i, 0)),
                # Weights/biases: constant index_map -> VMEM-resident across steps.
                pl.BlockSpec((IN_FEATURES, HIDDEN), lambda i: (0, 0)),
                pl.BlockSpec((1, HIDDEN), lambda i: (0, 0)),
                pl.BlockSpec((HIDDEN, c_pad), lambda i: (0, 0)),
                pl.BlockSpec((1, c_pad), lambda i: (0, 0)),
            ],
            out_specs=pl.BlockSpec((tb, c_pad), lambda i: (i, 0)),
        ),
        compiler_params=pltpu.CompilerParams(
            dimension_semantics=("parallel",),     # independent batch rows
            vmem_limit_bytes=32 * 1024 * 1024,     # headroom on v7x (64 MiB physical)
        ),
    )(x, w1, b1, w2p, b2p)

    # Narrow (32 B/row) slice back to the true number of classes.
    return out[:, :num_classes] if num_classes != c_pad else out


def init_params(key):
    """Deterministic init mirroring nn.Linear shapes (stored transposed: (in, out))."""
    k1, k2, k3, k4 = jax.random.split(key, 4)
    lim1 = 1.0 / jnp.sqrt(IN_FEATURES)
    lim2 = 1.0 / jnp.sqrt(HIDDEN)
    w1 = jax.random.uniform(k1, (IN_FEATURES, HIDDEN), jnp.float32, -lim1, lim1)
    b1 = jax.random.uniform(k2, (1, HIDDEN), jnp.float32, -lim1, lim1)
    w2 = jax.random.uniform(k3, (HIDDEN, NUM_CLASSES_TARGET), jnp.float32, -lim2, lim2)
    b2 = jax.random.uniform(k4, (1, NUM_CLASSES_TARGET), jnp.float32, -lim2, lim2)
    return w1, b1, w2, b2


if __name__ == "__main__":
    key = jax.random.PRNGKey(0)
    k_emb, k_params = jax.random.split(key)

    B = 2
    emb = jax.random.normal(k_emb, (B, 2, 128), dtype=jnp.float32)
    w1, b1, w2, b2 = init_params(k_params)

    prepared, C = prepare_classifier_params(w1, b1, w2, b2)

    # Jitted call-site: the reshape bitcast and the final narrow slice fuse away.
    fwd = jax.jit(lambda e: target_classifier_forward(e, prepared, C))
    pred = jax.block_until_ready(fwd(emb))

    # Reference check in plain JAX (same math as the PyTorch forward, exact sigmoid).
    x = emb.reshape(B, -1)
    ref = jax.nn.sigmoid(x @ w1 + b1) @ w2 + b2
    assert pred.shape == (B, NUM_CLASSES_TARGET)
    # Slightly loosened tolerance: the kernel uses the EUP approximate reciprocal for the
    # sigmoid denominator (rel. error ~2^-12), amplified by the 64-wide second linear.
    err = float(jnp.max(jnp.abs(pred - ref)))
    assert jnp.allclose(pred, ref, atol=2e-3, rtol=2e-3), err

    print("KERNEL_OK")
</pallas_src>

<mosaic_0001>
module attributes {stable_mosaic.version = 11 : i64} {
  func.func @_classifier_kernel(%arg0: i32, %arg1: memref<8x256xf32, #tpu.memory_space<vmem>>, %arg2: memref<256x64xf32, #tpu.memory_space<vmem>>, %arg3: memref<1x64xf32, #tpu.memory_space<vmem>>, %arg4: memref<64x8xf32, #tpu.memory_space<vmem>>, %arg5: memref<1x8xf32, #tpu.memory_space<vmem>>, %arg6: memref<8x8xf32, #tpu.memory_space<vmem>>) attributes {dimension_semantics = [#tpu.dimension_semantics<parallel>], iteration_bounds = array<i64: 1>, scalar_prefetch = 0 : i64, scratch_operands = 0 : i64, tpu.core_type = #tpu.core_type<tc>, window_params = [{transform_indices = @transform_0, window_bounds = array<i64: 8, 256>}, {pipeline_mode = #tpu.pipeline_mode<synchronous>, transform_indices = @transform_1, window_bounds = array<i64: 256, 64>}, {pipeline_mode = #tpu.pipeline_mode<synchronous>, transform_indices = @transform_2, window_bounds = array<i64: 1, 64>}, {pipeline_mode = #tpu.pipeline_mode<synchronous>, transform_indices = @transform_3, window_bounds = array<i64: 64, 8>}, {pipeline_mode = #tpu.pipeline_mode<synchronous>, transform_indices = @transform_4, window_bounds = array<i64: 1, 8>}, {transform_indices = @transform_5, window_bounds = array<i64: 8, 8>}]} {
    %c0 = arith.constant 0 : index
    %c0_0 = arith.constant 0 : index
    %0 = vector.load %arg1[%c0, %c0_0] : memref<8x256xf32, #tpu.memory_space<vmem>>, vector<8x256xf32>
    %c0_1 = arith.constant 0 : index
    %c0_2 = arith.constant 0 : index
    %1 = vector.load %arg2[%c0_1, %c0_2] : memref<256x64xf32, #tpu.memory_space<vmem>>, vector<256x64xf32>
    %cst = arith.constant dense<0.000000e+00> : vector<8x64xf32>
    %2 = tpu.matmul %0, %1, %cst {dimension_numbers = #tpu.dot_dimension_numbers<[1], [0], [0], [1], [0, 0, 1, 1], [], []>} : vector<8x256xf32>, vector<256x64xf32>, vector<8x64xf32> -> vector<8x64xf32>
    %c0_3 = arith.constant 0 : index
    %c0_4 = arith.constant 0 : index
    %3 = vector.load %arg3[%c0_3, %c0_4] : memref<1x64xf32, #tpu.memory_space<vmem>>, vector<1x64xf32>
    %4 = vector.broadcast %3 : vector<1x64xf32> to vector<8x64xf32>
    %5 = arith.addf %2, %4 : vector<8x64xf32>
    %cst_5 = arith.constant 0.000000e+00 : f32
    %6 = vector.broadcast %cst_5 : f32 to vector<8x64xf32>
    %7 = arith.subf %6, %5 : vector<8x64xf32>
    %8 = math.exp %7 : vector<8x64xf32>
    %cst_6 = arith.constant 1.000000e+00 : f32
    %9 = vector.broadcast %cst_6 : f32 to vector<8x64xf32>
    %10 = arith.addf %9, %8 : vector<8x64xf32>
    %11 = tpu.reciprocal %10 {approx = true} : vector<8x64xf32> -> vector<8x64xf32>
    %c0_7 = arith.constant 0 : index
    %c0_8 = arith.constant 0 : index
    %12 = vector.load %arg4[%c0_7, %c0_8] : memref<64x8xf32, #tpu.memory_space<vmem>>, vector<64x8xf32>
    %cst_9 = arith.constant dense<0.000000e+00> : vector<8x8xf32>
    %13 = tpu.matmul %11, %12, %cst_9 {dimension_numbers = #tpu.dot_dimension_numbers<[1], [0], [0], [1], [0, 0, 1, 1], [], []>} : vector<8x64xf32>, vector<64x8xf32>, vector<8x8xf32> -> vector<8x8xf32>
    %c0_10 = arith.constant 0 : index
    %c0_11 = arith.constant 0 : index
    %14 = vector.load %arg5[%c0_10, %c0_11] : memref<1x8xf32, #tpu.memory_space<vmem>>, vector<1x8xf32>
    %15 = vector.broadcast %14 : vector<1x8xf32> to vector<8x8xf32>
    %16 = arith.addf %13, %15 : vector<8x8xf32>
    %c0_12 = arith.constant 0 : index
    %c0_13 = arith.constant 0 : index
    %17 = vector.load %arg6[%c0_12, %c0_13] : memref<8x8xf32, #tpu.memory_space<vmem>>, vector<8x8xf32>
    tpu.vector_store %arg6[%c0_12, %c0_13], %16 {strides = array<i32>} : memref<8x8xf32, #tpu.memory_space<vmem>>, vector<8x8xf32>,
    return
  }
  func.func @transform_0(%arg0: i32) -> (i32, i32) {
    %c0_i32 = arith.constant 0 : i32
    %c0_i32_0 = arith.constant 0 : i32
    return %arg0, %c0_i32 : i32, i32
  }
  func.func @transform_1(%arg0: i32) -> (i32, i32) {
    %c0_i32 = arith.constant 0 : i32
    %c0_i32_0 = arith.constant 0 : i32
    %c0_i32_1 = arith.constant 0 : i32
    return %c0_i32, %c0_i32_0 : i32, i32
  }
  func.func @transform_2(%arg0: i32) -> (i32, i32) {
    %c0_i32 = arith.constant 0 : i32
    %c0_i32_0 = arith.constant 0 : i32
    %c0_i32_1 = arith.constant 0 : i32
    return %c0_i32, %c0_i32_0 : i32, i32
  }
  func.func @transform_3(%arg0: i32) -> (i32, i32) {
    %c0_i32 = arith.constant 0 : i32
    %c0_i32_0 = arith.constant 0 : i32
    %c0_i32_1 = arith.constant 0 : i32
    return %c0_i32, %c0_i32_0 : i32, i32
  }
  func.func @transform_4(%arg0: i32) -> (i32, i32) {
    %c0_i32 = arith.constant 0 : i32
    %c0_i32_0 = arith.constant 0 : i32
    %c0_i32_1 = arith.constant 0 : i32
    return %c0_i32, %c0_i32_0 : i32, i32
  }
  func.func @transform_5(%arg0: i32) -> (i32, i32) {
    %c0_i32 = arith.constant 0 : i32
    %c0_i32_0 = arith.constant 0 : i32
    return %arg0, %c0_i32 : i32, i32
  }
}

</mosaic_0001>

<llo_original>
// kernel: _lambda_.1
$region0: #{_lambda_.1}
  #allocation0 [shape = 'u32[]', space=smem, size = 0x4, offset = 0x4, fixed_abs, tag = 'smem constant byte address 0x4 - core index']
  #allocation1 [shape = 'u32[144,128]{1,0:T(1,128)}', space=vmem, size = 0x12000, scoped, tag = 'internal scratch']
  %s0 = inlined_call_operand.vmem [shape: f32[2,256], index: 0, kind: input, shape index: {}]
  %s1 = inlined_call_operand.hbm [shape: f32[256,64], index: 1, kind: input, shape index: {}]
  %s2 = inlined_call_operand.vmem [shape: f32[1,64], index: 2, kind: input, shape index: {}]
  %s3 = inlined_call_operand.hbm [shape: f32[64,8], index: 3, kind: input, shape index: {}]
  %s4 = inlined_call_operand.vmem [shape: f32[1,8], index: 4, kind: input, shape index: {}]
  %s5 = inlined_call_operand.hbm [shape: f32[2,8], index: 5, kind: output, shape index: {}]
  %s6 = sld [smem:[#allocation0]]
  $region38: #{_lambda_.1} parent=0
    _
  %s8 = ssub.s32 1, %s6
  %s9 = scalar_select 0, %s8, %s6
  $region1: #{_lambda_.1} parent=0
    #allocation2 [shape = 'u8[131072]{0}', space=vmem, size = 0x20000, scoped, tag = 'input window, operand 1, single buffered']
    #allocation3 [shape = 's32[1]{0}', space=sflag, size = 0x4, scoped, tag = 'scoped memory for _lambda_.1']
    #allocation4 [shape = 's32[1]{0}', space=sflag, size = 0x4, scoped, tag = 'scoped memory for _lambda_.1']
    #allocation5 [shape = 'u8[32768]{0}', space=vmem, size = 0x8000, scoped, tag = 'input window, operand 3, single buffered']
    #allocation6 [shape = 's32[1]{0}', space=sflag, size = 0x4, scoped, tag = 'scoped memory for _lambda_.1']
    #allocation7 [shape = 'u8[4096]{0}', space=vmem, size = 0x1000, scoped, tag = 'output window, operand 0, single buffered']
    %10 = vsyncpa [#allocation3], 0
    %11 = vsyncpa [#allocation6], 0
    %12 = vsyncpa [#allocation4], 0
    // Predicated region
    $region2: #{_lambda_.1} parent=1 // pred_check
      _
    $region3: #{_lambda_.1} parent=1 // pred_check_branch
      %14 = sbr.rel (0) target = $region5
    $region4: #{_lambda_.1} parent=1 // pred_region
      _
    $region5: #{_lambda_.1} parent=1 // pred_fallthru
      _
    // Predicated region
    $region6: #{_lambda_.1} parent=1 // pred_check
      _
    $region7: #{_lambda_.1} parent=1 // pred_check_branch
      %16 = sbr.rel (0) target = $region9
    $region8: #{_lambda_.1} parent=1 // pred_region
      %s18 = ssub.s32 4096, 4096
      %19 = vsyncadd [#allocation3], %s18
      %s20 = sshll.u32 [#allocation2], 4
      %s21 = int_to_ptr.vmem [resolvable:$true] %s20
      %26 = dma.hbm_to_vmem [thread:$0]  %s1, 4096, %s21, [#allocation3], 128, 128, 8
    $region9: #{_lambda_.1} parent=1 // pred_fallthru
      _
    // Predicated region
    $region10: #{_lambda_.1} parent=1 // pred_check
      _
    $region11: #{_lambda_.1} parent=1 // pred_check_branch
      %28 = sbr.rel (0) target = $region13
    $region12: #{_lambda_.1} parent=1 // pred_region
      _
    $region13: #{_lambda_.1} parent=1 // pred_fallthru
      _
    // Predicated region
    $region14: #{_lambda_.1} parent=1 // pred_check
      _
    $region15: #{_lambda_.1} parent=1 // pred_check_branch
      %30 = sbr.rel (0) target = $region17
    $region16: #{_lambda_.1} parent=1 // pred_region
      %s32 = ssub.s32 1024, 1024
      %33 = vsyncadd [#allocation6], %s32
      %s34 = sshll.u32 [#allocation5], 4
      %s35 = int_to_ptr.vmem [resolvable:$true] %s34
      %40 = dma.hbm_to_vmem [thread:$0]  %s3, 1024, %s35, [#allocation6], 128, 128, 8
    $region17: #{_lambda_.1} parent=1 // pred_fallthru
      _
    // Predicated region
    $region18: #{_lambda_.1} parent=1 // pred_check
      _
    $region19: #{_lambda_.1} parent=1 // pred_check_branch
      %42 = sbr.rel (0) target = $region21
    $region20: #{_lambda_.1} parent=1 // pred_region
      _
    $region21: #{_lambda_.1} parent=1 // pred_fallthru
      _
    // Predicated region
    $region22: #{_lambda_.1} parent=1 // pred_check
      _
    $region23: #{_lambda_.1} parent=1 // pred_check_branch
      %44 = sbr.rel (0) target = $region25
    $region24: #{_lambda_.1} parent=1 // pred_region
      %45 = dma.done [#allocation3], 4096
    $region25: #{_lambda_.1} parent=1 // pred_fallthru
      _
    // Predicated region
    $region26: #{_lambda_.1} parent=1 // pred_check
      _
    $region27: #{_lambda_.1} parent=1 // pred_check_branch
      %47 = sbr.rel (0) target = $region29
    $region28: #{_lambda_.1} parent=1 // pred_region
      %48 = dma.done [#allocation6], 1024
    $region29: #{_lambda_.1} parent=1 // pred_fallthru
      _
    %v49 = vld [vmem:[%s0] sm:$0xf]
    %v50 = vld [vmem:[%s0 + $0x4] sm:$0xf]
    %v51 = vld [vmem:[%s0 + $0x8] sm:$0xf]
    %v52 = vld [vmem:[%s0 + $0xc] sm:$0xf]
    %v53 = vld [vmem:[#allocation2] sm:$0xff]
    %v54 = vld [vmem:[#allocation2 + $0x8] sm:$0xff]
    %v55 = vld [vmem:[#allocation2 + $0x10] sm:$0xff]
    %v56 = vld [vmem:[#allocation2 + $0x18] sm:$0xff]
    %v57 = vld [vmem:[#allocation2 + $0x20] sm:$0xff]
    %v58 = vld [vmem:[#allocation2 + $0x28] sm:$0xff]
    %v59 = vld [vmem:[#allocation2 + $0x30] sm:$0xff]
    %v60 = vld [vmem:[#allocation2 + $0x38] sm:$0xff]
    %v61 = vld [vmem:[#allocation2 + $0x40] sm:$0xff]
    %v62 = vld [vmem:[#allocation2 + $0x48] sm:$0xff]
    %v63 = vld [vmem:[#allocation2 + $0x50] sm:$0xff]
    %v64 = vld [vmem:[#allocation2 + $0x58] sm:$0xff]
    %v65 = vld [vmem:[#allocation2 + $0x60] sm:$0xff]
    %v66 = vld [vmem:[#allocation2 + $0x68] sm:$0xff]
    %v67 = vld [vmem:[#allocation2 + $0x70] sm:$0xff]
    %v68 = vld [vmem:[#allocation2 + $0x78] sm:$0xff]
    %v69 = vld [vmem:[#allocation2 + $0x80] sm:$0xff]
    %v70 = vld [vmem:[#allocation2 + $0x88] sm:$0xff]
    %v71 = vld [vmem:[#allocation2 + $0x90] sm:$0xff]
    %v72 = vld [vmem:[#allocation2 + $0x98] sm:$0xff]
    %v73 = vld [vmem:[#allocation2 + $0xa0] sm:$0xff]
    %v74 = vld [vmem:[#allocation2 + $0xa8] sm:$0xff]
    %v75 = vld [vmem:[#allocation2 + $0xb0] sm:$0xff]
    %v76 = vld [vmem:[#allocation2 + $0xb8] sm:$0xff]
    %v77 = vld [vmem:[#allocation2 + $0xc0] sm:$0xff]
    %v78 = vld [vmem:[#allocation2 + $0xc8] sm:$0xff]
    %v79 = vld [vmem:[#allocation2 + $0xd0] sm:$0xff]
    %v80 = vld [vmem:[#allocation2 + $0xd8] sm:$0xff]
    %v81 = vld [vmem:[#allocation2 + $0xe0] sm:$0xff]
    %v82 = vld [vmem:[#allocation2 + $0xe8] sm:$0xff]
    %v83 = vld [vmem:[#allocation2 + $0xf0] sm:$0xff]
    %v84 = vld [vmem:[#allocation2 + $0xf8] sm:$0xff]
    %v85 = vld [vmem:[%s2] sm:$0x1]
    %v87 = vlaneseq
    %v88 = vshrl.u32 %v87, 7
    %v89 = vsub.s32 0, %v88
    %v90 = vrot.slane %v85, %v89
    %v96 = vcombine.low %v49, %v50
    %v97 = vcombine.low %v51, %v52
    %v99 = vunpack.c.l.s4 1983009808
    %v100 = vunpack.c.0.s8 %v99
    %v101 = vlaneseq
    %v102 = vshrl.u32 %v101, 7
    %v103 = vsub.s32 %v100, %v102
    %v104 = vrot.slane %v96, %v103
    %v106 = vunpack.c.l.s4 1983009808
    %v107 = vunpack.c.0.s8 %v106
    %v108 = vlaneseq
    %v109 = vshrl.u32 %v108, 7
    %v110 = vsub.s32 %v107, %v109
    %v111 = vrot.slane %v97, %v110
    %v112 = vcombine.low %v104, %v111
    %v113 = vcombine.high %v104, %v111
    %116 = vmatprep.subr.mxu0 0.0
    %117 = vmatpush1.msra.mxu0 %v68
    %118 = vmatprep.subr.mxu0 0.0
    %119 = vmatpush1.msra.mxu0 %v67
    %120 = vmatprep.subr.mxu0 0.0
    %121 = vmatpush1.msra.mxu0 %v66
    %122 = vmatprep.subr.mxu0 0.0
    %123 = vmatpush1.msra.mxu0 %v65
    %124 = vmatprep.subr.mxu0 0.0
    %125 = vmatpush1.msra.mxu0 %v64
    %126 = vmatprep.subr.mxu0 0.0
    %127 = vmatpush1.msra.mxu0 %v63
    %128 = vmatprep.subr.mxu0 0.0
    %129 = vmatpush1.msra.mxu0 %v62
    %130 = vmatprep.subr.mxu0 0.0
    %131 = vmatpush1.msra.mxu0 %v61
    %132 = vmatprep.subr.mxu0 0.0
    %133 = vmatpush1.msra.mxu0 %v60
    %134 = vmatprep.subr.mxu0 0.0
    %135 = vmatpush1.msra.mxu0 %v59
    %136 = vmatprep.subr.mxu0 0.0
    %137 = vmatpush1.msra.mxu0 %v58
    %138 = vmatprep.subr.mxu0 0.0
    %139 = vmatpush1.msra.mxu0 %v57
    %140 = vmatprep.subr.mxu0 0.0
    %141 = vmatpush1.msra.mxu0 %v56
    %142 = vmatprep.subr.mxu0 0.0
    %143 = vmatpush1.msra.mxu0 %v55
    %144 = vmatprep.subr.mxu0 0.0
    %145 = vmatpush1.msra.mxu0 %v54
    %146 = vmatprep.subr.mxu0 0.0
    %147 = vmatpush1.msra.mxu0 %v53
    %148 = vmatprep.subr.mxu0 0.0
    %149 = vmatpush2.msra.mxu0 %v84
    %150 = vmatprep.subr.mxu0 0.0
    %151 = vmatpush2.msra.mxu0 %v83
    %152 = vmatprep.subr.mxu0 0.0
    %153 = vmatpush2.msra.mxu0 %v82
    %154 = vmatprep.subr.mxu0 0.0
    %155 = vmatpush2.msra.mxu0 %v81
    %156 = vmatprep.subr.mxu0 0.0
    %157 = vmatpush2.msra.mxu0 %v80
    %158 = vmatprep.subr.mxu0 0.0
    %159 = vmatpush2.msra.mxu0 %v79
    %160 = vmatprep.subr.mxu0 0.0
    %161 = vmatpush2.msra.mxu0 %v78
    %162 = vmatprep.subr.mxu0 0.0
    %163 = vmatpush2.msra.mxu0 %v77
    %164 = vmatprep.subr.mxu0 0.0
    %165 = vmatpush2.msra.mxu0 %v76
    %166 = vmatprep.subr.mxu0 0.0
    %167 = vmatpush2.msra.mxu0 %v75
    %168 = vmatprep.subr.mxu0 0.0
    %169 = vmatpush2.msra.mxu0 %v74
    %170 = vmatprep.subr.mxu0 0.0
    %171 = vmatpush2.msra.mxu0 %v73
    %172 = vmatprep.subr.mxu0 0.0
    %173 = vmatpush2.msra.mxu0 %v72
    %174 = vmatprep.subr.mxu0 0.0
    %175 = vmatpush2.msra.mxu0 %v71
    %176 = vmatprep.subr.mxu0 0.0
    %177 = vmatpush2.msra.mxu0 %v70
    %178 = vmatprep.subr.mxu0 0.0
    %179 = vmatpush2.msra.mxu0 %v69
    %180 = vmatprep.mubr.f32.mxu0 %v113
    %181 = vmatmul.mubr.f32.gmra.mxu0 %v112
    %v182 = vpop.f32.mrf.mxu0
    %v183 = vadd.f32 %v90, %v182
    %v184 = vpop.f32.mrf.mxu0
    %185 = vdwg.mxu0
    %v186 = vsub.f32 0.0, %v183
    %v187 = vmul.f32 %v186, 1.442695
    %v188 = vpow.pop %v187
    %v189 = vadd.f32 %v188, 1.0
    %v190 = vrcp.pop %v189
    %v191 = vld [vmem:[#allocation5] sm:$0xff]
    %v192 = vld [vmem:[#allocation5 + $0x8] sm:$0xff]
    %v193 = vld [vmem:[#allocation5 + $0x10] sm:$0xff]
    %v194 = vld [vmem:[#allocation5 + $0x18] sm:$0xff]
    %v195 = vld [vmem:[#allocation5 + $0x20] sm:$0xff]
    %v196 = vld [vmem:[#allocation5 + $0x28] sm:$0xff]
    %v197 = vld [vmem:[#allocation5 + $0x30] sm:$0xff]
    %v198 = vld [vmem:[#allocation5 + $0x38] sm:$0xff]
    %v199 = vld [vmem:[%s4] sm:$0x1]
    %v201 = vlaneseq
    %v202 = vshrl.u32 %v201, 7
    %v203 = vsub.s32 0, %v202
    %v204 = vrot.slane %v199, %v203
    %vm206 = vcmask 523264
    %v208 = vsel %vm206, %v190, 0
    %210 = vmatprep.subr.mxu0 0.0
    %211 = vmatpush1.msra.mxu0 0.0
    %212 = vmatprep.subr.mxu0 0.0
    %213 = vmatpush1.msra.mxu0 0.0
    %214 = vmatprep.subr.mxu0 0.0
    %215 = vmatpush1.msra.mxu0 0.0
    %216 = vmatprep.subr.mxu0 0.0
    %217 = vmatpush1.msra.mxu0 0.0
    %218 = vmatprep.subr.mxu0 0.0
    %219 = vmatpush1.msra.mxu0 0.0
    %220 = vmatprep.subr.mxu0 0.0
    %221 = vmatpush1.msra.mxu0 0.0
    %222 = vmatprep.subr.mxu0 0.0
    %223 = vmatpush1.msra.mxu0 0.0
    %224 = vmatprep.subr.mxu0 0.0
    %225 = vmatpush1.msra.mxu0 0.0
    %226 = vmatprep.subr.mxu0 0.0
    %227 = vmatpush1.msra.mxu0 %v198
    %228 = vmatprep.subr.mxu0 0.0
    %229 = vmatpush1.msra.mxu0 %v197
    %230 = vmatprep.subr.mxu0 0.0
    %231 = vmatpush1.msra.mxu0 %v196
    %232 = vmatprep.subr.mxu0 0.0
    %233 = vmatpush1.msra.mxu0 %v195
    %234 = vmatprep.subr.mxu0 0.0
    %235 = vmatpush1.msra.mxu0 %v194
    %236 = vmatprep.subr.mxu0 0.0
    %237 = vmatpush1.msra.mxu0 %v193
    %238 = vmatprep.subr.mxu0 0.0
    %239 = vmatpush1.msra.mxu0 %v192
    %240 = vmatprep.subr.mxu0 0.0
    %241 = vmatpush1.msra.mxu0 %v191
    %242 = vmatprep.subr.mxu0 0.0
    %243 = vmatpush2.msra.mxu0 0.0
    %244 = vmatprep.subr.mxu0 0.0
    %245 = vmatpush2.msra.mxu0 0.0
    %246 = vmatprep.subr.mxu0 0.0
    %247 = vmatpush2.msra.mxu0 0.0
    %248 = vmatprep.subr.mxu0 0.0
    %249 = vmatpush2.msra.mxu0 0.0
    %250 = vmatprep.subr.mxu0 0.0
    %251 = vmatpush2.msra.mxu0 0.0
    %252 = vmatprep.subr.mxu0 0.0
    %253 = vmatpush2.msra.mxu0 0.0
    %254 = vmatprep.subr.mxu0 0.0
    %255 = vmatpush2.msra.mxu0 0.0
    %256 = vmatprep.subr.mxu0 0.0
    %257 = vmatpush2.msra.mxu0 0.0
    %258 = vmatprep.subr.mxu0 0.0
    %259 = vmatpush2.msra.mxu0 0.0
    %260 = vmatprep.subr.mxu0 0.0
    %261 = vmatpush2.msra.mxu0 0.0
    %262 = vmatprep.subr.mxu0 0.0
    %263 = vmatpush2.msra.mxu0 0.0
    %264 = vmatprep.subr.mxu0 0.0
    %265 = vmatpush2.msra.mxu0 0.0
    %266 = vmatprep.subr.mxu0 0.0
    %267 = vmatpush2.msra.mxu0 0.0
    %268 = vmatprep.subr.mxu0 0.0
    %269 = vmatpush2.msra.mxu0 0.0
    %270 = vmatprep.subr.mxu0 0.0
    %271 = vmatpush2.msra.mxu0 0.0
    %272 = vmatprep.subr.mxu0 0.0
    %273 = vmatpush2.msra.mxu0 0.0
    %274 = vmatprep.mubr.f32.mxu0 0.0
    %275 = vmatmul.mubr.f32.gmra.mxu0 %v208
    %v276 = vpop.f32.mrf.mxu0
    %v277 = vadd.f32 %v204, %v276
    %v278 = vpop.f32.mrf.mxu0
    %279 = vdwg.mxu0
    %vm280 = vcmask 64512
    %281 = vst.msk [vmem:[#allocation7] sm:$0xff] %vm280, %v277
    // Predicated region
    $region30: #{_lambda_.1} parent=1 // pred_check
      _
    $region31: #{_lambda_.1} parent=1 // pred_check_branch
      %283 = sbr.rel (0) target = $region33
    $region32: #{_lambda_.1} parent=1 // pred_region
      %s285 = ssub.s32 128, 32
      %286 = vsyncadd [#allocation4], %s285
      %s287 = sshll.u32 [#allocation7], 4
      %s288 = int_to_ptr.vmem [resolvable:$true] %s287
      %293 = dma.vmem_to_hbm [thread:$0]  %s288, 32, %s5, [#allocation4], 32, 32, 2
    $region33: #{_lambda_.1} parent=1 // pred_fallthru
      _
    // Predicated region
    $region34: #{_lambda_.1} parent=1 // pred_check
      _
    $region35: #{_lambda_.1} parent=1 // pred_check_branch
      %295 = sbr.rel (0) target = $region37
    $region36: #{_lambda_.1} parent=1 // pred_region
      %296 = dma.done [#allocation4], 128
    $region37: #{_lambda_.1} parent=1 // pred_fallthru
      _
    %297 = vsyncpa [#allocation3], 1
    %298 = vsyncpa [#allocation6], 1
    %299 = vsyncpa [#allocation4], 1

</llo_original>
